<compile_context>
chip_gen: v6e
topology: v6e:2x2x1
jax: 0.10.0
libtpu: 0.0.40
codegen_flags: <defaults>
</compile_context>

<pallas_src>
import functools
import math

import jax
import jax.numpy as jnp
from jax.experimental import pallas as pl
from jax.experimental.pallas import tpu as pltpu

_EPS = 1e-5
_INV_SQRT2 = 1.0 / math.sqrt(2.0)
_MASK_VALUE = -1e30  # large finite negative: no inf/NaN hazard in low precision


def _gelu_exact(x):
    # nn.GELU() default = exact erf form (kept for numerics parity with PyTorch).
    # TODO(synk): tanh-approx GELU would move this work to the EUP slot; only
    # worth it if a bundle dump shows VALU as the binding unit.
    return 0.5 * x * (1.0 + jax.lax.erf(x * _INV_SQRT2))


# ----------------------------------------------------------------------------
# Kernels
# ----------------------------------------------------------------------------

def qkv_proj_kernel(x_ref, w_ref, b_ref, o_ref, *, compute_dtype):
    """Fused Q|K|V projection: one (tile_m, D) @ (D, 3D) MXU pass + bias."""
    acc = jnp.dot(x_ref[...].astype(compute_dtype), w_ref[...],
                  preferred_element_type=jnp.float32) + b_ref[...]
    o_ref[...] = acc.astype(o_ref.dtype)


def attention_kernel(q_ref, k_ref, v_ref, o_ref, m_scr, l_scr, acc_scr, *,
                     scale, heads_per_block, head_dim, compute_dtype,
                     approx_recip):
    """Flash-style causal attention for one (batch, head-group, q-tile).

    Blocks are (tile_s, G*head_dim) lane-dense column windows of the fused
    (B, S, 3D) qkv tensor; the grid's last ("arbitrary") axis walks KV tiles
    with online softmax.  KV tiles strictly above the causal diagonal are
    skipped (their index map is clamped, so they are never DMA'd either).
    """
    iq = pl.program_id(2)
    ikv = pl.program_id(3)
    G, hd = heads_per_block, head_dim
    Ts = q_ref.shape[0]

    @pl.when(ikv == 0)
    def _init():
        m_scr[...] = jnp.full_like(m_scr, _MASK_VALUE)
        l_scr[...] = jnp.zeros_like(l_scr)
        acc_scr[...] = jnp.zeros_like(acc_scr)

    @pl.when(ikv <= iq)                      # causal block skip
    def _update():
        row = jax.lax.broadcasted_iota(jnp.int32, (Ts, Ts), 0)
        col = jax.lax.broadcasted_iota(jnp.int32, (Ts, Ts), 1)
        # The mask only matters on the diagonal block; fully-visible blocks pass.
        keep = jnp.logical_or(ikv < iq, col <= row)
        for a in range(G):                   # static unroll over grouped heads
            sl = slice(a * hd, (a + 1) * hd)
            qa = q_ref[:, sl].astype(compute_dtype)
            ka = k_ref[:, sl].astype(compute_dtype)
            va = v_ref[:, sl].astype(compute_dtype)
            s = jax.lax.dot_general(qa, ka, (((1,), (1,)), ((), ())),
                                    preferred_element_type=jnp.float32) * scale
            s = jnp.where(keep, s, _MASK_VALUE)
            m_prev = m_scr[a]                                  # (Ts, 1)
            m_new = jnp.maximum(m_prev, jnp.max(s, axis=-1, keepdims=True))
            alpha = jnp.exp(m_prev - m_new)
            p = jnp.exp(s - m_new)
            l_scr[a] = alpha * l_scr[a] + jnp.sum(p, axis=-1, keepdims=True)
            # TODO(synk): attention-weight dropout (p=0.2) treated as identity.
            acc_scr[a] = alpha * acc_scr[a] + jnp.dot(
                p.astype(compute_dtype), va, preferred_element_type=jnp.float32)
            m_scr[a] = m_new

    @pl.when(ikv == pl.num_programs(3) - 1)
    def _finalize():
        for a in range(G):
            sl = slice(a * hd, (a + 1) * hd)
            inv_l = pl.reciprocal(l_scr[a], approx=approx_recip)   # EUP
            o_ref[:, sl] = (acc_scr[a] * inv_l).astype(o_ref.dtype)


def out_proj_residual_kernel(ctx_ref, x_ref, w_ref, b_ref, r_ref, part_ref, *,
                             compute_dtype):
    """r = x + (context @ Wo + bo), row-tiled.  Also emits the per-tile BN1
    partial statistics (sum, sumsq) so no standalone stats re-read is needed."""
    att = jnp.dot(ctx_ref[...].astype(compute_dtype), w_ref[...],
                  preferred_element_type=jnp.float32) + b_ref[...]
    r = x_ref[...].astype(jnp.float32) + att
    r_ref[...] = r.astype(r_ref.dtype)
    part_ref[0:1, :] = jnp.sum(r, axis=0, keepdims=True)
    part_ref[1:2, :] = jnp.sum(r * r, axis=0, keepdims=True)


def bn_stats_combine_kernel(part_ref, stats_ref, *, n_rows):
    """Reduce (n_tiles, 2, D) partial (sum, sumsq) into (mean, biased var)."""
    totals = jnp.sum(part_ref[...], axis=0)                # (2, D)
    inv_n = 1.0 / float(n_rows)
    mean = totals[0:1, :] * inv_n
    # E[x^2] - mean^2, clamped at 0 to guard against f32 cancellation.
    # TODO(synk): switch to a Welford/centered combine if BS*D grows very large.
    var = jnp.maximum(totals[1:2, :] * inv_n - mean * mean, 0.0)
    stats_ref[0:1, :] = mean
    stats_ref[1:2, :] = var


def bn_mlp_kernel(r_ref, stats_ref, g_ref, be_ref,
                  w1_ref, b1_ref, w2_ref, b2_ref,
                  o_ref, part_ref, acc_ref, *, compute_dtype):
    """For one row tile: chunk the 4D hidden dim (grid axis 1, 'arbitrary';
    n_h == 1 when the MLP weights are VMEM-resident), accumulate
    GELU(r@W1_c + b1_c) @ W2_c into f32 scratch, and at the last chunk add
    b2 + the BN1-normalized residual (adn).  Also emits BN2 partial stats."""
    c = pl.program_id(1)

    @pl.when(c == 0)
    def _init():
        acc_ref[...] = jnp.zeros_like(acc_ref)

    r = r_ref[...].astype(jnp.float32)                       # (tile_m, D)
    # TODO(synk): residual dropout (p=0.2) on the MLP input treated as identity.
    h = jnp.dot(r.astype(compute_dtype), w1_ref[...],
                preferred_element_type=jnp.float32) + b1_ref[...]
    h = _gelu_exact(h)                                       # f32 element-wise
    acc_ref[...] += jnp.dot(h.astype(compute_dtype), w2_ref[...],
                            preferred_element_type=jnp.float32)

    @pl.when(c == pl.num_programs(1) - 1)
    def _finalize():
        mean = stats_ref[0:1, :]
        var = stats_ref[1:2, :]
        adn = (r - mean) * jax.lax.rsqrt(var + _EPS) * g_ref[...] + be_ref[...]
        y = acc_ref[...] + b2_ref[...] + adn
        o_ref[...] = y.astype(o_ref.dtype)
        part_ref[0:1, :] = jnp.sum(y, axis=0, keepdims=True)
        part_ref[1:2, :] = jnp.sum(y * y, axis=0, keepdims=True)


def bn_apply_kernel(z_ref, stats_ref, g_ref, be_ref, o_ref):
    """Final BatchNorm1d normalization, row-tiled."""
    z = z_ref[...].astype(jnp.float32)
    mean = stats_ref[0:1, :]
    var = stats_ref[1:2, :]
    o_ref[...] = ((z - mean) * jax.lax.rsqrt(var + _EPS) * g_ref[...]
                  + be_ref[...]).astype(o_ref.dtype)


# ----------------------------------------------------------------------------
# Wrapper
# ----------------------------------------------------------------------------

def _pick_tile(total, preferred):
    for t in preferred:
        if t <= total and total % t == 0:
            return t
    return total


def _default_vmem_limit():
    # v5e/v6e: 128 MiB physical -> allow ~64 MiB scoped; v7x: 64 MiB -> 32 MiB.
    try:
        cap = int(pltpu.get_tpu_info().vmem_capacity_bytes)
        return min(cap // 2, 96 * 1024 * 1024)
    except Exception:
        return 32 * 1024 * 1024   # safe everywhere


def _cp(dims, vmem_limit):
    # TODO(synk): mark constant-index weight/bias/stats blocks with
    # pipeline_mode=pl.Buffered(1) to save VMEM on v7x once single-buffered
    # constant blocks are confirmed supported on the target jax version.
    return pltpu.CompilerParams(dimension_semantics=dims,
                                vmem_limit_bytes=vmem_limit)


def gpt_block(x, params, n_heads, *, compute_dtype=jnp.bfloat16,
              residual_dtype=jnp.float32, tile_m=None, tile_s=None,
              tile_h=None, vmem_limit_bytes=None):
    """Forward pass of GPTBlock.  compute_dtype is the MXU operand dtype
    (bf16 recommended; accumulation is always f32, element-wise math is f32).
    residual_dtype controls the HBM storage of the residual stream."""
    (wq, bq, wk, bk, wv, bv, wo, bo, g1, be1, w1, b1, w2, b2, g2, be2) = params
    B, S, D = x.shape
    H = n_heads
    assert D % H == 0
    hd = D // H
    BS = B * S
    DH = w1.shape[1]                      # 4 * D
    f32 = jnp.float32
    cdt = compute_dtype
    approx_recip = (cdt == jnp.bfloat16)  # exact division on the strict f32 path

    if vmem_limit_bytes is None:
        vmem_limit_bytes = _default_vmem_limit()

    # Head grouping: smallest divisor G of H with (G*hd) % 128 == 0 so every
    # HBM-facing attention block is lane-dense.
    G = H
    for cand in range(1, H + 1):
        if H % cand == 0 and (cand * hd) % 128 == 0:
            G = cand
            break
    # TODO(synk): head_dims whose multiples never hit 128 (e.g. 96) fall back to
    # all-heads-per-step blocks, which may be lane-padded.
    n_g = H // G
    GH = G * hd

    if tile_m is None:
        tile_m = _pick_tile(BS, (512, 256, 128, 64, 32, 16, 8))
    if tile_s is None:
        tile_s = _pick_tile(S, (256, 128, 64, 32, 16, 8))
    if tile_h is None:
        w_bytes = 2 * D * DH * jnp.dtype(cdt).itemsize
        if w_bytes <= vmem_limit_bytes // 4:
            tile_h = DH                   # resident MLP weights: DMA'd once
        else:
            tile_h = _pick_tile(DH, (2048, 1024, 512, 256, 128))
    assert BS % tile_m == 0 and (tile_m % 8 == 0 or tile_m == BS)
    assert S % tile_s == 0 and (tile_s % 8 == 0 or tile_s == S)
    assert DH % tile_h == 0 and (tile_h % 128 == 0 or tile_h == DH)
    n_m = BS // tile_m
    n_q = S // tile_s
    n_h = DH // tile_h

    # Fused QKV weight: one MXU pass with N = 3D.  Matmul weights in compute
    # dtype (halves weight DMA for bf16); biases / gamma / beta stay f32.
    # TODO(synk): for very large D the resident (D, 3D)/(D, D) weight blocks
    # should themselves be column-chunked on an extra grid axis.
    wqkv = jnp.concatenate([wq, wk, wv], axis=1).astype(cdt)     # (D, 3D)
    bqkv = jnp.concatenate([bq, bk, bv], axis=1).astype(f32)     # (1, 3D)
    wo_c = wo.astype(cdt)
    w1_c = w1.astype(cdt)
    w2_c = w2.astype(cdt)

    x2 = x.reshape(BS, D).astype(f32)

    # --- 1. fused QKV projection (row-tiled, weights resident) -------------
    qkv = pl.pallas_call(
        functools.partial(qkv_proj_kernel, compute_dtype=cdt),
        out_shape=jax.ShapeDtypeStruct((BS, 3 * D), cdt),
        grid=(n_m,),
        in_specs=[pl.BlockSpec((tile_m, D), lambda i: (i, 0)),
                  pl.BlockSpec((D, 3 * D), lambda i: (0, 0)),
                  pl.BlockSpec((1, 3 * D), lambda i: (0, 0))],
        out_specs=pl.BlockSpec((tile_m, 3 * D), lambda i: (i, 0)),
        compiler_params=_cp(("parallel",), vmem_limit_bytes),
    )(x2, wqkv, bqkv)

    # --- 2. flash-style causal attention, heads indexed via BlockSpec -------
    qkv3 = qkv.reshape(B, S, 3 * D)        # free reshape (leading-dim split)
    ctx3 = pl.pallas_call(
        functools.partial(attention_kernel, scale=1.0 / math.sqrt(hd),
                          heads_per_block=G, head_dim=hd,
                          compute_dtype=cdt, approx_recip=approx_recip),
        out_shape=jax.ShapeDtypeStruct((B, S, D), cdt),
        grid=(B, n_g, n_q, n_q),
        in_specs=[
            # Q group g -> column block g; K -> n_g + g; V -> 2*n_g + g.
            pl.BlockSpec((None, tile_s, GH),
                         lambda b, g, iq, ikv: (b, iq, g)),
            pl.BlockSpec((None, tile_s, GH),
                         lambda b, g, iq, ikv: (b, jnp.minimum(ikv, iq),
                                                n_g + g)),
            pl.BlockSpec((None, tile_s, GH),
                         lambda b, g, iq, ikv: (b, jnp.minimum(ikv, iq),
                                                2 * n_g + g)),
        ],
        out_specs=pl.BlockSpec((None, tile_s, GH),
                               lambda b, g, iq, ikv: (b, iq, g)),
        scratch_shapes=[pltpu.VMEM((G, tile_s, 1), jnp.float32),
                        pltpu.VMEM((G, tile_s, 1), jnp.float32),
                        pltpu.VMEM((G, tile_s, hd), jnp.float32)],
        compiler_params=_cp(("parallel", "parallel", "parallel", "arbitrary"),
                            vmem_limit_bytes),
    )(qkv3, qkv3, qkv3)

    ctx2 = ctx3.reshape(BS, D)             # free reshape (already head-merged)

    # --- 3. output projection + residual + fused BN1 partial stats ----------
    r, part1 = pl.pallas_call(
        functools.partial(out_proj_residual_kernel, compute_dtype=cdt),
        out_shape=(jax.ShapeDtypeStruct((BS, D), residual_dtype),
                   jax.ShapeDtypeStruct((n_m, 2, D), f32)),
        grid=(n_m,),
        in_specs=[pl.BlockSpec((tile_m, D), lambda i: (i, 0)),   # ctx
                  pl.BlockSpec((tile_m, D), lambda i: (i, 0)),   # x
                  pl.BlockSpec((D, D), lambda i: (0, 0)),        # Wo
                  pl.BlockSpec((1, D), lambda i: (0, 0))],       # bo
        out_specs=[pl.BlockSpec((tile_m, D), lambda i: (i, 0)),
                   pl.BlockSpec((None, 2, D), lambda i: (i, 0, 0))],
        compiler_params=_cp(("parallel",), vmem_limit_bytes),
    )(ctx2, x2, wo_c, bo.astype(f32))

    # --- 4. tiny combine of BN1 partials -> (mean, var) ---------------------
    # TODO(synk): BatchNorm running-stat buffers (momentum) are not updated;
    # batch statistics are used, matching a fresh module's training forward.
    stats1 = pl.pallas_call(
        functools.partial(bn_stats_combine_kernel, n_rows=BS),
        out_shape=jax.ShapeDtypeStruct((2, D), f32),
    )(part1)

    # --- 5. BN1-apply + MLP (resident or chunked hidden) + adn residual -----
    y_pre, part2 = pl.pallas_call(
        functools.partial(bn_mlp_kernel, compute_dtype=cdt),
        out_shape=(jax.ShapeDtypeStruct((BS, D), residual_dtype),
                   jax.ShapeDtypeStruct((n_m, 2, D), f32)),
        grid=(n_m, n_h),                                        # reduction last
        in_specs=[pl.BlockSpec((tile_m, D), lambda i, c: (i, 0)),   # r
                  pl.BlockSpec((2, D), lambda i, c: (0, 0)),        # stats1
                  pl.BlockSpec((1, D), lambda i, c: (0, 0)),        # gamma1
                  pl.BlockSpec((1, D), lambda i, c: (0, 0)),        # beta1
                  pl.BlockSpec((D, tile_h), lambda i, c: (0, c)),   # W1 chunk
                  pl.BlockSpec((1, tile_h), lambda i, c: (0, c)),   # b1 chunk
                  pl.BlockSpec((tile_h, D), lambda i, c: (c, 0)),   # W2 chunk
                  pl.BlockSpec((1, D), lambda i, c: (0, 0))],       # b2
        out_specs=[pl.BlockSpec((tile_m, D), lambda i, c: (i, 0)),
                   pl.BlockSpec((None, 2, D), lambda i, c: (i, 0, 0))],
        scratch_shapes=[pltpu.VMEM((tile_m, D), jnp.float32)],
        compiler_params=_cp(("parallel", "arbitrary"), vmem_limit_bytes),
    )(r, stats1, g1, be1, w1_c, b1.astype(f32), w2_c, b2.astype(f32))

    # --- 6. combine BN2 partials ---------------------------------------------
    stats2 = pl.pallas_call(
        functools.partial(bn_stats_combine_kernel, n_rows=BS),
        out_shape=jax.ShapeDtypeStruct((2, D), f32),
    )(part2)

    # --- 7. BN2 apply --------------------------------------------------------
    out = pl.pallas_call(
        bn_apply_kernel,
        out_shape=jax.ShapeDtypeStruct((BS, D), x.dtype),
        grid=(n_m,),
        in_specs=[pl.BlockSpec((tile_m, D), lambda i: (i, 0)),
                  pl.BlockSpec((2, D), lambda i: (0, 0)),
                  pl.BlockSpec((1, D), lambda i: (0, 0)),
                  pl.BlockSpec((1, D), lambda i: (0, 0))],
        out_specs=pl.BlockSpec((tile_m, D), lambda i: (i, 0)),
        compiler_params=_cp(("parallel",), vmem_limit_bytes),
    )(y_pre, stats2, g2, be2)

    return out.reshape(B, S, D)


# ----------------------------------------------------------------------------
# Pure-JAX reference (same math, explicit HIGHEST precision) + param init
# ----------------------------------------------------------------------------

def gpt_block_ref(x, params, n_heads):
    (wq, bq, wk, bk, wv, bv, wo, bo, g1, be1, w1, b1, w2, b2, g2, be2) = params
    B, S, D = x.shape
    hd = D // n_heads
    P = jax.lax.Precision.HIGHEST
    dot = functools.partial(jnp.dot, precision=P)
    q = (dot(x, wq) + bq).reshape(B, S, n_heads, hd).transpose(0, 2, 1, 3)
    k = (dot(x, wk) + bk).reshape(B, S, n_heads, hd).transpose(0, 2, 1, 3)
    v = (dot(x, wv) + bv).reshape(B, S, n_heads, hd).transpose(0, 2, 1, 3)
    s = jnp.einsum("bhqd,bhkd->bhqk", q, k, precision=P) / math.sqrt(hd)
    keep = jnp.tril(jnp.ones((S, S), bool))
    s = jnp.where(keep, s, -jnp.inf)
    p = jax.nn.softmax(s, axis=-1)
    att = jnp.einsum("bhqk,bhkd->bhqd", p, v,
                     precision=P).transpose(0, 2, 1, 3).reshape(B, S, D)
    att = dot(att, wo) + bo
    r = x + att
    m1 = jnp.mean(r, axis=(0, 1), keepdims=True)
    v1 = jnp.mean((r - m1) ** 2, axis=(0, 1), keepdims=True)
    adn = (r - m1) * jax.lax.rsqrt(v1 + _EPS) * g1 + be1
    h = dot(r, w1) + b1
    h = 0.5 * h * (1.0 + jax.lax.erf(h * _INV_SQRT2))
    h = dot(h, w2) + b2
    y = h + adn
    m2 = jnp.mean(y, axis=(0, 1), keepdims=True)
    v2 = jnp.mean((y - m2) ** 2, axis=(0, 1), keepdims=True)
    return (y - m2) * jax.lax.rsqrt(v2 + _EPS) * g2 + be2


def init_params(key, d_model):
    """Deterministic synthetic parameters, shapes matching the PyTorch module.
    Linear weights are pre-transposed to (in, out); biases are (1, out)."""
    ks = jax.random.split(key, 12)
    u = lambda k, shape, fan_in: jax.random.uniform(
        k, shape, jnp.float32, -1.0 / math.sqrt(fan_in), 1.0 / math.sqrt(fan_in))
    D = d_model
    wq = u(ks[0], (D, D), D); bq = u(ks[1], (1, D), D)
    wk = u(ks[2], (D, D), D); bk = u(ks[3], (1, D), D)
    wv = u(ks[4], (D, D), D); bv = u(ks[5], (1, D), D)
    wo = u(ks[6], (D, D), D); bo = u(ks[7], (1, D), D)
    g1 = jnp.ones((1, D), jnp.float32); be1 = jnp.zeros((1, D), jnp.float32)
    w1 = u(ks[8], (D, 4 * D), D); b1 = u(ks[9], (1, 4 * D), D)
    w2 = u(ks[10], (4 * D, D), 4 * D); b2 = u(ks[11], (1, D), 4 * D)
    g2 = jnp.ones((1, D), jnp.float32); be2 = jnp.zeros((1, D), jnp.float32)
    return (wq, bq, wk, bk, wv, bv, wo, bo, g1, be1, w1, b1, w2, b2, g2, be2)


if __name__ == "__main__":
    # Small shapes: batch=2, seq=32, d_model=128, heads=4 -> head_dim=32, so
    # 4 heads are grouped into one 128-lane attention block; B*S = 64 rows.
    B, S, D, H = 2, 32, 128, 4
    key = jax.random.PRNGKey(0)
    kx, kp = jax.random.split(key)
    x = jax.random.normal(kx, (B, S, D), jnp.float32)
    params = init_params(kp, D)

    ref = jax.block_until_ready(gpt_block_ref(x, params, n_heads=H))

    # Strict correctness check: f32 MXU operands, f32 residual stream, small
    # tiles so the flash/causal-skip (2x2 q/kv tiles), chunked-MLP (2 chunks)
    # and multi-tile BN partial-stats paths are all exercised.
    out_f32 = jax.block_until_ready(
        gpt_block(x, params, n_heads=H, compute_dtype=jnp.float32,
                  residual_dtype=jnp.float32, tile_m=16, tile_s=16, tile_h=256))
    assert out_f32.shape == (B, S, D)
    err_f32 = float(jnp.max(jnp.abs(out_f32 - ref)))
    assert err_f32 < 1e-3, f"f32 path mismatch: {err_f32}"

    # Performance configuration: bf16 MXU operands, bf16 residual stream,
    # default (large / resident-weight) tiles.  Loose sanity tolerance; the
    # strict check above covers the structure.
    out_bf16 = jax.block_until_ready(
        gpt_block(x, params, n_heads=H, compute_dtype=jnp.bfloat16,
                  residual_dtype=jnp.bfloat16))
    err_bf16 = float(jnp.max(jnp.abs(out_bf16 - ref)))
    assert err_bf16 < 2.5e-1, f"bf16 path mismatch: {err_bf16}"

    print("KERNEL_OK")
</pallas_src>

<mosaic_0001>
module attributes {stable_mosaic.version = 11 : i64} {
  func.func @qkv_proj_kernel(%arg0: i32, %arg1: memref<16x128xf32, #tpu.memory_space<vmem>>, %arg2: memref<128x384xf32, #tpu.memory_space<vmem>>, %arg3: memref<1x384xf32, #tpu.memory_space<vmem>>, %arg4: memref<16x384xf32, #tpu.memory_space<vmem>>) attributes {dimension_semantics = [#tpu.dimension_semantics<parallel>], iteration_bounds = array<i64: 4>, scalar_prefetch = 0 : i64, scratch_operands = 0 : i64, tpu.core_type = #tpu.core_type<tc>, window_params = [{transform_indices = @transform_0, window_bounds = array<i64: 16, 128>}, {pipeline_mode = #tpu.pipeline_mode<synchronous>, transform_indices = @transform_1, window_bounds = array<i64: 128, 384>}, {pipeline_mode = #tpu.pipeline_mode<synchronous>, transform_indices = @transform_2, window_bounds = array<i64: 1, 384>}, {transform_indices = @transform_3, window_bounds = array<i64: 16, 384>}]} {
    %c0 = arith.constant 0 : index
    %c0_0 = arith.constant 0 : index
    %0 = vector.load %arg1[%c0, %c0_0] : memref<16x128xf32, #tpu.memory_space<vmem>>, vector<16x128xf32>
    %c0_1 = arith.constant 0 : index
    %c0_2 = arith.constant 0 : index
    %1 = vector.load %arg2[%c0_1, %c0_2] : memref<128x384xf32, #tpu.memory_space<vmem>>, vector<128x384xf32>
    %cst = arith.constant dense<0.000000e+00> : vector<16x384xf32>
    %2 = tpu.matmul %0, %1, %cst {dimension_numbers = #tpu.dot_dimension_numbers<[1], [0], [0], [1], [0, 0, 1, 1], [], []>} : vector<16x128xf32>, vector<128x384xf32>, vector<16x384xf32> -> vector<16x384xf32>
    %c0_3 = arith.constant 0 : index
    %c0_4 = arith.constant 0 : index
    %3 = vector.load %arg3[%c0_3, %c0_4] : memref<1x384xf32, #tpu.memory_space<vmem>>, vector<1x384xf32>
    %4 = vector.broadcast %3 : vector<1x384xf32> to vector<16x384xf32>
    %5 = arith.addf %2, %4 : vector<16x384xf32>
    %c0_5 = arith.constant 0 : index
    %c0_6 = arith.constant 0 : index
    %6 = vector.load %arg4[%c0_5, %c0_6] : memref<16x384xf32, #tpu.memory_space<vmem>>, vector<16x384xf32>
    tpu.vector_store %arg4[%c0_5, %c0_6], %5 {strides = array<i32>} : memref<16x384xf32, #tpu.memory_space<vmem>>, vector<16x384xf32>,
    return
  }
  func.func @transform_0(%arg0: i32) -> (i32, i32) {
    %c0_i32 = arith.constant 0 : i32
    %c0_i32_0 = arith.constant 0 : i32
    return %arg0, %c0_i32 : i32, i32
  }
  func.func @transform_1(%arg0: i32) -> (i32, i32) {
    %c0_i32 = arith.constant 0 : i32
    %c0_i32_0 = arith.constant 0 : i32
    %c0_i32_1 = arith.constant 0 : i32
    return %c0_i32, %c0_i32_0 : i32, i32
  }
  func.func @transform_2(%arg0: i32) -> (i32, i32) {
    %c0_i32 = arith.constant 0 : i32
    %c0_i32_0 = arith.constant 0 : i32
    %c0_i32_1 = arith.constant 0 : i32
    return %c0_i32, %c0_i32_0 : i32, i32
  }
  func.func @transform_3(%arg0: i32) -> (i32, i32) {
    %c0_i32 = arith.constant 0 : i32
    %c0_i32_0 = arith.constant 0 : i32
    return %arg0, %c0_i32 : i32, i32
  }
}

</mosaic_0001>

<llo_original>
// kernel: tpu_custom_call.1
$region0: #{tpu_custom_call.1}
  #allocation0 [shape = 'u32[]', space=smem, size = 0x4, offset = 0x4, fixed_abs, tag = 'smem constant byte address 0x4 - core index']
  #allocation1 [shape = 'u32[144,128]{1,0:T(1,128)}', space=vmem, size = 0x12000, scoped, tag = 'internal scratch']
  %s0 = inlined_call_operand.hbm [shape: f32[64,128], index: 0, kind: input, shape index: {}]
  %s1 = inlined_call_operand.hbm [shape: f32[128,384], index: 1, kind: input, shape index: {}]
  %s2 = inlined_call_operand.vmem [shape: f32[1,384], index: 2, kind: input, shape index: {}]
  %s3 = inlined_call_operand.hbm [shape: f32[64,384], index: 3, kind: output, shape index: {}]
  %s4 = sld [smem:[#allocation0]]
  $region53: #{tpu_custom_call.1} parent=0
    _
  %s6 = ssub.s32 1, %s4
  %s7 = scalar_select 0, %s6, %s4
  $region1: #{tpu_custom_call.1} parent=0
    #allocation2 [shape = 'u8[16384]{0}', space=vmem, size = 0x4000, scoped, tag = 'input window, operand 0']
    #allocation3 [shape = 's32[2]{0}', space=sflag, size = 0x8, scoped, tag = 'scoped memory for tpu_custom_call.1']
    #allocation4 [shape = 's32[2]{0}', space=sflag, size = 0x8, scoped, tag = 'scoped memory for tpu_custom_call.1']
    #allocation5 [shape = 'u8[196608]{0}', space=vmem, size = 0x30000, scoped, tag = 'input window, operand 1, single buffered']
    #allocation6 [shape = 's32[1]{0}', space=sflag, size = 0x4, scoped, tag = 'scoped memory for tpu_custom_call.1']
    #allocation7 [shape = 'u8[49152]{0}', space=vmem, size = 0xc000, scoped, tag = 'output window, operand 0']
    %8 = vsyncpa [#allocation3], 0
    %s9 = scalar_lea.sflag [#allocation3], 1
    %10 = vsyncpa %s9, 0
    %11 = vsyncpa [#allocation6], 0
    %12 = vsyncpa [#allocation4], 0
    %s13 = scalar_lea.sflag [#allocation4], 1
    %14 = vsyncpa %s13, 0
    loop: start=0, step=1, limit=6
    $region2: #{tpu_custom_call.1} parent=1 // loop_pre_header
      _
    $region3: #{tpu_custom_call.1} parent=1 // loop_header
      %s16 = sphi 0, %s20
      %p17 = scmp.ge.s32.totalorder %s16, 6
      %s26 = sphi 0, %s28
      %s29 = sphi 0, %s26
      %s30 = sphi 0, %s29
      %s46 = sphi 0, %s30
      %s50 = sphi 0, %s50
      %s52 = sphi 0, %s50
      %s53 = sphi 0, %s52
      %s67 = sphi 0, %s53
      %s71 = sphi 0, %s71
      %s73 = sphi 0, %s71
      %s74 = sphi 0, %s73
      %s88 = sphi 0, %s74
      %s94 = sphi 0, %s96
      %s97 = sphi 0, %s94
      %s98 = sphi 0, %s97
      %s114 = sphi 0, %s98
    $region4: #{tpu_custom_call.1} parent=1 // loop_header_branch
      %19 = sbr.rel (%p17) target = $region8
    $region5: #{tpu_custom_call.1} parent=1 // loop_body
      %s21 = ssub.s32 %s16, 1
      %s22 = ssub.s32 %s16, 2
      %s23 = sadd.s32 %s16, 1
      %s24 = ssub.s32 %s16, %s23
      %p25 = scmp.eq.s32.totalorder %s24, 0
      %s27 = sadd.s32 %s26, 1
      %s28 = scalar_select %p25, %s26, %s27
      %p31 = pneg %p25
      %p32 = scmp.eq.s32.totalorder %s16, 3
      %p33 = por %p31, %p32
      %p34 = scmp.ne.s32.totalorder %s26, %s29
      %p35 = scmp.eq.s32.totalorder %s16, 0
      %p36 = por %p34, %p35
      %p37 = scmp.ne.s32.totalorder %s26, %s29
      %p38 = scmp.eq.s32.totalorder %s21, 3
      %p39 = por %p37, %p38
      %p40 = scmp.ne.s32.totalorder %s29, %s30
      %p41 = scmp.eq.s32.totalorder %s21, 0
      %p42 = por %p40, %p41
      %p43 = scmp.ne.s32.totalorder %s29, %s30
      %p44 = scmp.eq.s32.totalorder %s22, 3
      %p45 = por %p43, %p44
      %p47 = scmp.ne.s32.totalorder %s30, %s46
      %p48 = scmp.eq.s32.totalorder %s22, 0
      %p49 = por %p47, %p48
      %s51 = sadd.s32 %s50, 1
      %p54 = scmp.eq.s32.totalorder %s16, 3
      %p55 = scmp.ne.s32.totalorder %s50, %s52
      %p56 = scmp.eq.s32.totalorder %s16, 0
      %p57 = por %p55, %p56
      %p58 = scmp.ne.s32.totalorder %s50, %s52
      %p59 = scmp.eq.s32.totalorder %s21, 3
      %p60 = por %p58, %p59
      %p61 = scmp.ne.s32.totalorder %s52, %s53
      %p62 = scmp.eq.s32.totalorder %s21, 0
      %p63 = por %p61, %p62
      %p64 = scmp.ne.s32.totalorder %s52, %s53
      %p65 = scmp.eq.s32.totalorder %s22, 3
      %p66 = por %p64, %p65
      %p68 = scmp.ne.s32.totalorder %s53, %s67
      %p69 = scmp.eq.s32.totalorder %s22, 0
      %p70 = por %p68, %p69
      %s72 = sadd.s32 %s71, 1
      %p75 = scmp.eq.s32.totalorder %s16, 3
      %p76 = scmp.ne.s32.totalorder %s71, %s73
      %p77 = scmp.eq.s32.totalorder %s16, 0
      %p78 = por %p76, %p77
      %p79 = scmp.ne.s32.totalorder %s71, %s73
      %p80 = scmp.eq.s32.totalorder %s21, 3
      %p81 = por %p79, %p80
      %p82 = scmp.ne.s32.totalorder %s73, %s74
      %p83 = scmp.eq.s32.totalorder %s21, 0
      %p84 = por %p82, %p83
      %p85 = scmp.ne.s32.totalorder %s73, %s74
      %p86 = scmp.eq.s32.totalorder %s22, 3
      %p87 = por %p85, %p86
      %p89 = scmp.ne.s32.totalorder %s74, %s88
      %p90 = scmp.eq.s32.totalorder %s22, 0
      %p91 = por %p89, %p90
      %s92 = ssub.s32 %s16, %s23
      %p93 = scmp.eq.s32.totalorder %s92, 0
      %s95 = sadd.s32 %s94, 1
      %s96 = scalar_select %p93, %s94, %s95
      %p99 = pneg %p93
      %p100 = scmp.eq.s32.totalorder %s16, 3
      %p101 = por %p99, %p100
      %p102 = scmp.ne.s32.totalorder %s94, %s97
      %p103 = scmp.eq.s32.totalorder %s16, 0
      %p104 = por %p102, %p103
      %p105 = scmp.ne.s32.totalorder %s94, %s97
      %p106 = scmp.eq.s32.totalorder %s21, 3
      %p107 = por %p105, %p106
      %p108 = scmp.ne.s32.totalorder %s97, %s98
      %p109 = scmp.eq.s32.totalorder %s21, 0
      %p110 = por %p108, %p109
      %p111 = scmp.ne.s32.totalorder %s97, %s98
      %p112 = scmp.eq.s32.totalorder %s22, 3
      %p113 = por %p111, %p112
      %p115 = scmp.ne.s32.totalorder %s98, %s114
      %p116 = scmp.eq.s32.totalorder %s22, 0
      %p117 = por %p115, %p116
      %p118 = scmp.le.s32.totalorder 1, %s16
      %p119 = scmp.lt.s32.totalorder %s16, 5
      %p120 = pnand %p118, %p119
      %p121 = pneg %p120
      // Predicated region
      $region9: #{tpu_custom_call.1} parent=5 // pred_check
        _
      $region10: #{tpu_custom_call.1} parent=5 // pred_check_branch
        %123 = sbr.rel (%p120) target = $region12
      $region11: #{tpu_custom_call.1} parent=5 // pred_region
        %s124 = ssub.s32 %s16, 1
        // Predicated region
        $region13: #{tpu_custom_call.1} parent=11 // pred_check
          %p125 = pneg %p63
        $region14: #{tpu_custom_call.1} parent=11 // pred_check_branch
          %127 = sbr.rel (%p125) target = $region16
        $region15: #{tpu_custom_call.1} parent=11 // pred_region
          %s129 = ssub.s32 6144, 6144
          %130 = vsyncadd [#allocation6], %s129
          %s131 = sshll.u32 [#allocation5], 4
          %s132 = int_to_ptr.vmem [resolvable:$true] %s131
          %137 = dma.hbm_to_vmem [thread:$0]  %s1, 6144, %s132, [#allocation6], 384, 384, 24
        $region16: #{tpu_custom_call.1} parent=11 // pred_fallthru
          _
        // Predicated region
        $region17: #{tpu_custom_call.1} parent=11 // pred_check
          %p138 = pneg %p84
        $region18: #{tpu_custom_call.1} parent=11 // pred_check_branch
          %140 = sbr.rel (%p138) target = $region20
        $region19: #{tpu_custom_call.1} parent=11 // pred_region
          _
        $region20: #{tpu_custom_call.1} parent=11 // pred_fallthru
          _
      $region12: #{tpu_custom_call.1} parent=5 // pred_fallthru
        _
      %p141 = scmp.lt.s32.totalorder %s16, 4
      // Predicated region
      $region21: #{tpu_custom_call.1} parent=5 // pred_check
        %p142 = pneg %p141
      $region22: #{tpu_custom_call.1} parent=5 // pred_check_branch
        %144 = sbr.rel (%p142) target = $region24
      $region23: #{tpu_custom_call.1} parent=5 // pred_region
        // Predicated region
        $region25: #{tpu_custom_call.1} parent=23 // pred_check
          %p145 = pneg %p36
        $region26: #{tpu_custom_call.1} parent=23 // pred_check_branch
          %147 = sbr.rel (%p145) target = $region28
        $region27: #{tpu_custom_call.1} parent=23 // pred_region
          %s148 = sand.u32 %s26, 1
          %s149 = scalar_lea.sflag [#allocation3], %s148
          %s150 = sand.u32 %s26, 1
          %s151 = smul.addr %s150, 16
          %s152 = scalar_lea.vmem [#allocation2], %s151
          %s153 = smul.u32 2, %s16
          %s155 = ssub.s32 256, 256
          %156 = vsyncadd %s149, %s155
          %s157 = smul.addr %s153, 128
          %s158 = scalar_lea.hbm %s0, %s157
          %s159 = sshll.u32 %s152, 4
          %s160 = int_to_ptr.vmem [resolvable:$true] %s159
          %165 = dma.hbm_to_vmem [thread:$0]  %s158, 256, %s160, %s149, 128, 128, 8
        $region28: #{tpu_custom_call.1} parent=23 // pred_fallthru
          _
      $region24: #{tpu_custom_call.1} parent=5 // pred_fallthru
        _
      %p166 = scmp.le.s32.totalorder 1, %s16
      %p167 = scmp.lt.s32.totalorder %s16, 5
      %p168 = pnand %p166, %p167
      %p169 = pneg %p168
      // Predicated region
      $region29: #{tpu_custom_call.1} parent=5 // pred_check
        _
      $region30: #{tpu_custom_call.1} parent=5 // pred_check_branch
        %171 = sbr.rel (%p168) target = $region32
      $region31: #{tpu_custom_call.1} parent=5 // pred_region
        %s172 = ssub.s32 %s16, 1
        %s173 = sand.u32 %s29, 1
        %s174 = scalar_lea.sflag [#allocation3], %s173
        %s175 = sand.u32 %s29, 1
        %s176 = smul.addr %s175, 16
        %s177 = scalar_lea.vmem [#allocation2], %s176
        // Predicated region
        $region33: #{tpu_custom_call.1} parent=31 // pred_check
          %p178 = pneg %p42
        $region34: #{tpu_custom_call.1} parent=31 // pred_check_branch
          %180 = sbr.rel (%p178) target = $region36
        $region35: #{tpu_custom_call.1} parent=31 // pred_region
          %181 = dma.done %s174, 256
        $region36: #{tpu_custom_call.1} parent=31 // pred_fallthru
          _
        // Predicated region
        $region37: #{tpu_custom_call.1} parent=31 // pred_check
          %p182 = pneg %p63
        $region38: #{tpu_custom_call.1} parent=31 // pred_check_branch
          %184 = sbr.rel (%p182) target = $region40
        $region39: #{tpu_custom_call.1} parent=31 // pred_region
          %185 = dma.done [#allocation6], 6144
        $region40: #{tpu_custom_call.1} parent=31 // pred_fallthru
          _
        %s186 = sand.u32 %s29, 1
        %s187 = scalar_lea.sflag [#allocation3], %s186
        %s188 = sand.u32 %s29, 1
        %s189 = smul.addr %s188, 16
        %s190 = scalar_lea.vmem [#allocation2], %s189
        %p191 = pneg %p42
        %p192 = pneg %p39
        %p193 = pneg %p63
        %p194 = pneg %p60
        %p195 = pneg %p84
        %p196 = pneg %p81
        %p197 = pneg %p110
        %p198 = pneg %p107
        %s199 = sand.u32 %s97, 1
        %s200 = scalar_lea.sflag [#allocation4], %s199
        %s201 = sand.u32 %s97, 1
        %s202 = smul.addr %s201, 48
        %s203 = scalar_lea.vmem [#allocation7], %s202
        %s204 = smul.u32 2, %s21
        %s205 = smul.u32 2, %s21
        %v206 = vld [vmem:[%s177] sm:$0xff]
        %v207 = vld [vmem:[%s177 + $0x8] sm:$0xff]
        %v208 = vld [vmem:[#allocation5] sm:$0xff]
        %v209 = vld [vmem:[#allocation5 + $0x8] sm:$0xff]
        %v210 = vld [vmem:[#allocation5 + $0x10] sm:$0xff]
        %v211 = vld [vmem:[#allocation5 + $0x18] sm:$0xff]
        %v212 = vld [vmem:[#allocation5 + $0x20] sm:$0xff]
        %v213 = vld [vmem:[#allocation5 + $0x28] sm:$0xff]
        %v214 = vld [vmem:[#allocation5 + $0x30] sm:$0xff]
        %v215 = vld [vmem:[#allocation5 + $0x38] sm:$0xff]
        %v216 = vld [vmem:[#allocation5 + $0x40] sm:$0xff]
        %v217 = vld [vmem:[#allocation5 + $0x48] sm:$0xff]
        %v218 = vld [vmem:[#allocation5 + $0x50] sm:$0xff]
        %v219 = vld [vmem:[#allocation5 + $0x58] sm:$0xff]
        %v220 = vld [vmem:[#allocation5 + $0x60] sm:$0xff]
        %v221 = vld [vmem:[#allocation5 + $0x68] sm:$0xff]
        %v222 = vld [vmem:[#allocation5 + $0x70] sm:$0xff]
        %v223 = vld [vmem:[#allocation5 + $0x78] sm:$0xff]
        %v224 = vld [vmem:[#allocation5 + $0x80] sm:$0xff]
        %v225 = vld [vmem:[#allocation5 + $0x88] sm:$0xff]
        %v226 = vld [vmem:[#allocation5 + $0x90] sm:$0xff]
        %v227 = vld [vmem:[#allocation5 + $0x98] sm:$0xff]
        %v228 = vld [vmem:[#allocation5 + $0xa0] sm:$0xff]
        %v229 = vld [vmem:[#allocation5 + $0xa8] sm:$0xff]
        %v230 = vld [vmem:[#allocation5 + $0xb0] sm:$0xff]
        %v231 = vld [vmem:[#allocation5 + $0xb8] sm:$0xff]
        %v232 = vld [vmem:[#allocation5 + $0xc0] sm:$0xff]
        %v233 = vld [vmem:[#allocation5 + $0xc8] sm:$0xff]
        %v234 = vld [vmem:[#allocation5 + $0xd0] sm:$0xff]
        %v235 = vld [vmem:[#allocation5 + $0xd8] sm:$0xff]
        %v236 = vld [vmem:[#allocation5 + $0xe0] sm:$0xff]
        %v237 = vld [vmem:[#allocation5 + $0xe8] sm:$0xff]
        %v238 = vld [vmem:[#allocation5 + $0xf0] sm:$0xff]
        %v239 = vld [vmem:[#allocation5 + $0xf8] sm:$0xff]
        %v240 = vld [vmem:[#allocation5 + $0x100] sm:$0xff]
        %v241 = vld [vmem:[#allocation5 + $0x108] sm:$0xff]
        %v242 = vld [vmem:[#allocation5 + $0x110] sm:$0xff]
        %v243 = vld [vmem:[#allocation5 + $0x118] sm:$0xff]
        %v244 = vld [vmem:[#allocation5 + $0x120] sm:$0xff]
        %v245 = vld [vmem:[#allocation5 + $0x128] sm:$0xff]
        %v246 = vld [vmem:[#allocation5 + $0x130] sm:$0xff]
        %v247 = vld [vmem:[#allocation5 + $0x138] sm:$0xff]
        %v248 = vld [vmem:[#allocation5 + $0x140] sm:$0xff]
        %v249 = vld [vmem:[#allocation5 + $0x148] sm:$0xff]
        %v250 = vld [vmem:[#allocation5 + $0x150] sm:$0xff]
        %v251 = vld [vmem:[#allocation5 + $0x158] sm:$0xff]
        %v252 = vld [vmem:[#allocation5 + $0x160] sm:$0xff]
        %v253 = vld [vmem:[#allocation5 + $0x168] sm:$0xff]
        %v254 = vld [vmem:[#allocation5 + $0x170] sm:$0xff]
        %v255 = vld [vmem:[#allocation5 + $0x178] sm:$0xff]
        %v256 = vld [vmem:[%s2] sm:$0x7]
        %v258 = vlaneseq
        %v259 = vshrl.u32 %v258, 7
        %v260 = vsub.s32 0, %v259
        %v261 = vrot.slane %v256, %v260
        %v262 = vlaneseq
        %v263 = vshrl.u32 %v262, 7
        %v264 = vsub.s32 1, %v263
        %v265 = vrot.slane %v256, %v264
        %v266 = vlaneseq
        %v267 = vshrl.u32 %v266, 7
        %v268 = vsub.s32 2, %v267
        %v269 = vrot.slane %v256, %v268
        %273 = vmatprep.subr.mxu0 %v254
        %274 = vmatpush1.msra.mxu0 %v253
        %275 = vmatprep.subr.mxu0 %v251
        %276 = vmatpush1.msra.mxu0 %v250
        %277 = vmatprep.subr.mxu0 %v248
        %278 = vmatpush1.msra.mxu0 %v247
        %279 = vmatprep.subr.mxu0 %v245
        %280 = vmatpush1.msra.mxu0 %v244
        %281 = vmatprep.subr.mxu0 %v242
        %282 = vmatpush1.msra.mxu0 %v241
        %283 = vmatprep.subr.mxu0 %v239
        %284 = vmatpush1.msra.mxu0 %v238
        %285 = vmatprep.subr.mxu0 %v236
        %286 = vmatpush1.msra.mxu0 %v235
        %287 = vmatprep.subr.mxu0 %v233
        %288 = vmatpush1.msra.mxu0 %v232
        %289 = vmatprep.subr.mxu0 %v230
        %290 = vmatpush1.msra.mxu0 %v229
        %291 = vmatprep.subr.mxu0 %v227
        %292 = vmatpush1.msra.mxu0 %v226
        %293 = vmatprep.subr.mxu0 %v224
        %294 = vmatpush1.msra.mxu0 %v223
        %295 = vmatprep.subr.mxu0 %v221
        %296 = vmatpush1.msra.mxu0 %v220
        %297 = vmatprep.subr.mxu0 %v218
        %298 = vmatpush1.msra.mxu0 %v217
        %299 = vmatprep.subr.mxu0 %v215
        %300 = vmatpush1.msra.mxu0 %v214
        %301 = vmatprep.subr.mxu0 %v212
        %302 = vmatpush1.msra.mxu0 %v211
        %303 = vmatprep.subr.mxu0 %v209
        %304 = vmatpush1.msra.mxu0 %v208
        %305 = vmatprep.subr.mxu0 0.0
        %306 = vmatpush2.msra.mxu0 0.0
        %307 = vmatprep.subr.mxu0 0.0
        %308 = vmatpush2.msra.mxu0 0.0
        %309 = vmatprep.subr.mxu0 0.0
        %310 = vmatpush2.msra.mxu0 0.0
        %311 = vmatprep.subr.mxu0 0.0
        %312 = vmatpush2.msra.mxu0 0.0
        %313 = vmatprep.subr.mxu0 0.0
        %314 = vmatpush2.msra.mxu0 0.0
        %315 = vmatprep.subr.mxu0 0.0
        %316 = vmatpush2.msra.mxu0 0.0
        %317 = vmatprep.subr.mxu0 0.0
        %318 = vmatpush2.msra.mxu0 0.0
        %319 = vmatprep.subr.mxu0 0.0
        %320 = vmatpush2.msra.mxu0 0.0
        %321 = vmatprep.subr.mxu0 0.0
        %322 = vmatpush2.msra.mxu0 0.0
        %323 = vmatprep.subr.mxu0 0.0
        %324 = vmatpush2.msra.mxu0 0.0
        %325 = vmatprep.subr.mxu0 0.0
        %326 = vmatpush2.msra.mxu0 0.0
        %327 = vmatprep.subr.mxu0 0.0
        %328 = vmatpush2.msra.mxu0 0.0
        %329 = vmatprep.subr.mxu0 0.0
        %330 = vmatpush2.msra.mxu0 0.0
        %331 = vmatprep.subr.mxu0 0.0
        %332 = vmatpush2.msra.mxu0 0.0
        %333 = vmatprep.subr.mxu0 0.0
        %334 = vmatpush2.msra.mxu0 0.0
        %335 = vmatprep.subr.mxu0 0.0
        %336 = vmatpush2.msra.mxu0 0.0
        %337 = vmatprep.mubr.f32.mxu0 0.0
        %338 = vmatmul.mubr.f32.gmra.mxu0 %v206
        %v339 = vpop.f32.mrf.mxu0
        %v340 = vadd.f32 %v261, %v339
        %v341 = vpop.f32.mrf.mxu0
        %v342 = vadd.f32 %v265, %v341
        %343 = vmatprep.mubr.f32.mxu0 0.0
        %344 = vmatmul.mubr.f32.gmra.mxu0 %v207
        %v345 = vpop.f32.mrf.mxu0
        %v346 = vadd.f32 %v261, %v345
        %v347 = vpop.f32.mrf.mxu0
        %v348 = vadd.f32 %v265, %v347
        %349 = vdwg.mxu0
        %350 = vmatprep.subr.mxu0 0.0
        %351 = vmatpush1.msra.mxu0 %v255
        %352 = vmatprep.subr.mxu0 0.0
        %353 = vmatpush1.msra.mxu0 %v252
        %354 = vmatprep.subr.mxu0 0.0
        %355 = vmatpush1.msra.mxu0 %v249
        %356 = vmatprep.subr.mxu0 0.0
        %357 = vmatpush1.msra.mxu0 %v246
        %358 = vmatprep.subr.mxu0 0.0
        %359 = vmatpush1.msra.mxu0 %v243
        %360 = vmatprep.subr.mxu0 0.0
        %361 = vmatpush1.msra.mxu0 %v240
        %362 = vmatprep.subr.mxu0 0.0
        %363 = vmatpush1.msra.mxu0 %v237
        %364 = vmatprep.subr.mxu0 0.0
        %365 = vmatpush1.msra.mxu0 %v234
        %366 = vmatprep.subr.mxu0 0.0
        %367 = vmatpush1.msra.mxu0 %v231
        %368 = vmatprep.subr.mxu0 0.0
        %369 = vmatpush1.msra.mxu0 %v228
        %370 = vmatprep.subr.mxu0 0.0
        %371 = vmatpush1.msra.mxu0 %v225
        %372 = vmatprep.subr.mxu0 0.0
        %373 = vmatpush1.msra.mxu0 %v222
        %374 = vmatprep.subr.mxu0 0.0
        %375 = vmatpush1.msra.mxu0 %v219
        %376 = vmatprep.subr.mxu0 0.0
        %377 = vmatpush1.msra.mxu0 %v216
        %378 = vmatprep.subr.mxu0 0.0
        %379 = vmatpush1.msra.mxu0 %v213
        %380 = vmatprep.subr.mxu0 0.0
        %381 = vmatpush1.msra.mxu0 %v210
        %382 = vmatprep.subr.mxu0 0.0
        %383 = vmatpush2.msra.mxu0 0.0
        %384 = vmatprep.subr.mxu0 0.0
        %385 = vmatpush2.msra.mxu0 0.0
        %386 = vmatprep.subr.mxu0 0.0
        %387 = vmatpush2.msra.mxu0 0.0
        %388 = vmatprep.subr.mxu0 0.0
        %389 = vmatpush2.msra.mxu0 0.0
        %390 = vmatprep.subr.mxu0 0.0
        %391 = vmatpush2.msra.mxu0 0.0
        %392 = vmatprep.subr.mxu0 0.0
        %393 = vmatpush2.msra.mxu0 0.0
        %394 = vmatprep.subr.mxu0 0.0
        %395 = vmatpush2.msra.mxu0 0.0
        %396 = vmatprep.subr.mxu0 0.0
        %397 = vmatpush2.msra.mxu0 0.0
        %398 = vmatprep.subr.mxu0 0.0
        %399 = vmatpush2.msra.mxu0 0.0
        %400 = vmatprep.subr.mxu0 0.0
        %401 = vmatpush2.msra.mxu0 0.0
        %402 = vmatprep.subr.mxu0 0.0
        %403 = vmatpush2.msra.mxu0 0.0
        %404 = vmatprep.subr.mxu0 0.0
        %405 = vmatpush2.msra.mxu0 0.0
        %406 = vmatprep.subr.mxu0 0.0
        %407 = vmatpush2.msra.mxu0 0.0
        %408 = vmatprep.subr.mxu0 0.0
        %409 = vmatpush2.msra.mxu0 0.0
        %410 = vmatprep.subr.mxu0 0.0
        %411 = vmatpush2.msra.mxu0 0.0
        %412 = vmatprep.subr.mxu0 0.0
        %413 = vmatpush2.msra.mxu0 0.0
        %414 = vmatprep.mubr.f32.mxu0 0.0
        %415 = vmatmul.mubr.f32.gmra.mxu0 %v206
        %v416 = vpop.f32.mrf.mxu0
        %v417 = vadd.f32 %v269, %v416
        %v418 = vpop.f32.mrf.mxu0
        %419 = vmatprep.mubr.f32.mxu0 0.0
        %420 = vmatmul.mubr.f32.gmra.mxu0 %v207
        %v421 = vpop.f32.mrf.mxu0
        %v422 = vadd.f32 %v269, %v421
        %v423 = vpop.f32.mrf.mxu0
        %424 = vdwg.mxu0
        %425 = vst [vmem:[%s203] sm:$0xff] %v340
        %426 = vst [vmem:[%s203 + $0x8] sm:$0xff] %v342
        %427 = vst [vmem:[%s203 + $0x10] sm:$0xff] %v417
        %428 = vst [vmem:[%s203 + $0x18] sm:$0xff] %v346
        %429 = vst [vmem:[%s203 + $0x20] sm:$0xff] %v348
        %430 = vst [vmem:[%s203 + $0x28] sm:$0xff] %v422
        %s431 = sand.u32 %s97, 1
        %s432 = scalar_lea.sflag [#allocation4], %s431
        %s433 = sand.u32 %s97, 1
        %s434 = smul.addr %s433, 48
        %s435 = scalar_lea.vmem [#allocation7], %s434
        // Predicated region
        $region41: #{tpu_custom_call.1} parent=31 // pred_check
          %p436 = pneg %p107
        $region42: #{tpu_custom_call.1} parent=31 // pred_check_branch
          %438 = sbr.rel (%p436) target = $region44
        $region43: #{tpu_custom_call.1} parent=31 // pred_region
          %s439 = smul.u32 2, %s21
          %s441 = ssub.s32 768, 768
          %442 = vsyncadd %s432, %s441
          %s443 = smul.addr %s439, 3
          %s444 = smul.addr %s443, 128
          %s445 = scalar_lea.hbm %s3, %s444
          %s446 = sshll.u32 %s435, 4
          %s447 = int_to_ptr.vmem [resolvable:$true] %s446
          %452 = dma.vmem_to_hbm [thread:$0]  %s447, 768, %s445, %s432, 384, 384, 24
        $region44: #{tpu_custom_call.1} parent=31 // pred_fallthru
          _
      $region32: #{tpu_custom_call.1} parent=5 // pred_fallthru
        _
      %p453 = scmp.le.s32.totalorder 2, %s16
      // Predicated region
      $region45: #{tpu_custom_call.1} parent=5 // pred_check
        %p454 = pneg %p453
      $region46: #{tpu_custom_call.1} parent=5 // pred_check_branch
        %456 = sbr.rel (%p454) target = $region48
      $region47: #{tpu_custom_call.1} parent=5 // pred_region
        %s457 = ssub.s32 %s16, 2
        // Predicated region
        $region49: #{tpu_custom_call.1} parent=47 // pred_check
          %p458 = pneg %p113
        $region50: #{tpu_custom_call.1} parent=47 // pred_check_branch
          %460 = sbr.rel (%p458) target = $region52
        $region51: #{tpu_custom_call.1} parent=47 // pred_region
          %s461 = sand.u32 %s98, 1
          %s462 = scalar_lea.sflag [#allocation4], %s461
          %s463 = sand.u32 %s98, 1
          %s464 = smul.addr %s463, 48
          %s465 = scalar_lea.vmem [#allocation7], %s464
          %466 = dma.done %s462, 768
        $region52: #{tpu_custom_call.1} parent=47 // pred_fallthru
          _
      $region48: #{tpu_custom_call.1} parent=5 // pred_fallthru
        _
    $region6: #{tpu_custom_call.1} parent=1 // loop_footer
      %s20 = sadd.s32 1, %s16
    $region7: #{tpu_custom_call.1} parent=1 // loop_footer_branch
      %15 = sbr.rel target = $region3
    $region8: #{tpu_custom_call.1} parent=1 // loop_exit
      _
    %467 = vsyncpa [#allocation3], 1
    %s468 = scalar_lea.sflag [#allocation3], 1
    %469 = vsyncpa %s468, 1
    %470 = vsyncpa [#allocation6], 1
    %471 = vsyncpa [#allocation4], 1
    %s472 = scalar_lea.sflag [#allocation4], 1
    %473 = vsyncpa %s472, 1

</llo_original>
